<compile_context>
chip_gen: v7x
topology: tpu7x:2x2x1
jax: 0.10.0
libtpu: 0.0.40
codegen_flags: <defaults>
</compile_context>

<pallas_src>
import jax
import jax.numpy as jnp
from jax.experimental import pallas as pl
from jax.experimental.pallas import tpu as pltpu

EPS = 1e-10


# --------------------------------------------------------------------------- #
# Kernels
# --------------------------------------------------------------------------- #
def _l1norm_kernel(x_ref, o_ref):
    """Single-pass kernel: full-D row tile, per-row L1 normalize."""
    x = x_ref[...]                                               # (tm, D)
    norm = jnp.sum(jnp.abs(x).astype(jnp.float32), axis=1, keepdims=True) + EPS
    inv = pl.reciprocal(norm, approx=False)                      # (tm, 1) f32
    # Scale in f32, cast once at the end (free: kernel is HBM-bound).
    o_ref[...] = (x.astype(jnp.float32) * inv).astype(o_ref.dtype)


def _l1norm_sum_kernel(x_ref, norm_ref, acc_ref):
    """Wide-D pass 1: accumulate per-row sum(|x|) over D-chunks."""
    @pl.when(pl.program_id(1) == 0)
    def _init():
        acc_ref[...] = jnp.zeros_like(acc_ref)

    acc_ref[...] += jnp.sum(
        jnp.abs(x_ref[...]).astype(jnp.float32), axis=1, keepdims=True)

    @pl.when(pl.program_id(1) == pl.num_programs(1) - 1)
    def _done():
        norm_ref[...] = acc_ref[...] + EPS


def _l1norm_scale_kernel(norm_ref, x_ref, o_ref):
    """Wide-D pass 2: rescale each D-chunk by the precomputed row norm."""
    inv = pl.reciprocal(norm_ref[...], approx=False)             # (tm, 1) f32
    o_ref[...] = (x_ref[...].astype(jnp.float32) * inv).astype(o_ref.dtype)


# --------------------------------------------------------------------------- #
# Tiling heuristics
# --------------------------------------------------------------------------- #
def _per_buffer_budget_bytes():
    """Per-VMEM-buffer budget (~4 double-buffered windows live at once).

    2 MiB default keeps the footprint safely under v5e's 16 MiB default scoped
    VMEM; v6e/v7x (32 MiB default scoped limit) get 6 MiB so very wide rows
    still tile into MiB-scale blocks.  ~1-2 MiB tiles already reach ~85% of
    the HBM roofline, so the conservative budget costs nothing on v5e.
    """
    budget = 2 * 1024 * 1024
    try:
        kind = jax.devices()[0].device_kind.lower()
        if ("v6" in kind) or ("v7" in kind) or ("tpu7" in kind) or ("7x" in kind):
            budget = 6 * 1024 * 1024
    except Exception:
        pass
    return budget


def _choose_row_tile(N, D, dtype, per_buf_budget):
    """Row tile (multiple of the sublane count) targeting ~8 grid steps, tiles
    >= ~1 MiB, an even step count (v7x TC balance), and a per-buffer footprint
    within the VMEM budget."""
    itemsize = jnp.dtype(dtype).itemsize
    sub = max(8, 32 // itemsize)          # sublane multiple: 8 f32 / 16 bf16 / 32 i8
    if N <= sub:
        return N                          # single block equal to full dim: legal
    row_bytes = max(D * itemsize, 1)

    def rs(t):                            # round down to the sublane multiple
        return max((t // sub) * sub, sub)

    n_pad = pl.cdiv(N, sub) * sub
    tm_cap = min(rs(per_buf_budget // row_bytes), n_pad)     # VMEM-budget ceiling
    tm_floor = min(rs((1 << 20) // row_bytes), tm_cap)       # keep tiles >= ~1 MiB

    tm = rs(pl.cdiv(N, 8))                # aim for ~8 grid steps
    tm = min(max(tm, tm_floor), tm_cap)

    # Prefer an even number of grid steps (v7x: 2 TCs want balanced work).
    steps = pl.cdiv(N, tm)
    if steps > 1 and steps % 2 == 1:
        tm_even = rs(pl.cdiv(N, steps + 1))
        if pl.cdiv(N, tm_even) % 2 == 0 and 2 * tm_even >= tm_floor:
            tm = tm_even
    return tm


# --------------------------------------------------------------------------- #
# Wrapper
# --------------------------------------------------------------------------- #
def l1norm(x, *, tm=None, d_chunk=None, vmem_limit_bytes=None):
    """L1-normalize each row of a 2-D array x of shape (N, D)."""
    if x.ndim != 2:
        raise ValueError(f"l1norm expects a 2-D (N, D) input, got {x.shape}")
    N, D = x.shape
    itemsize = jnp.dtype(x.dtype).itemsize
    budget = _per_buffer_budget_bytes()
    sub = max(8, 32 // itemsize)

    # Lane-dense output: pad D to a multiple of 128 and slice afterwards.
    # Zero columns do not change the L1 norm.
    # TODO(synk): for very small D (<~64) a row-packing layout (several logical
    # rows per 128-lane row) would avoid the padding traffic entirely.
    d_pad = D if D % 128 == 0 else pl.cdiv(D, 128) * 128

    cp_extra = {}
    if vmem_limit_bytes is not None:
        cp_extra["vmem_limit_bytes"] = vmem_limit_bytes

    # ---------------- single-pass path (full-D row tiles fit the budget) ----
    chunked = d_chunk is not None or (sub * d_pad * itemsize > budget)
    if not chunked:
        xp = x if d_pad == D else jnp.pad(x, ((0, 0), (0, d_pad - D)))
        tm_ = _choose_row_tile(N, d_pad, x.dtype, budget) if tm is None else min(tm, N)

        out = pl.pallas_call(
            _l1norm_kernel,
            out_shape=jax.ShapeDtypeStruct((N, d_pad), x.dtype),
            grid=(pl.cdiv(N, tm_),),
            in_specs=[pl.BlockSpec((tm_, d_pad), lambda i: (i, 0))],
            out_specs=pl.BlockSpec((tm_, d_pad), lambda i: (i, 0)),
            compiler_params=pltpu.CompilerParams(
                dimension_semantics=("parallel",), **cp_extra),
            cost_estimate=pl.CostEstimate(
                flops=3 * N * d_pad,
                transcendentals=0,
                bytes_accessed=2 * N * d_pad * itemsize),
        )(xp)
        return out if d_pad == D else out[:, :D]

    # ---------------- D-chunked two-pass path (very wide rows) --------------
    # Chunk size: multiple of 128, sized so ~256 rows x td stays within budget.
    if d_chunk is None:
        td = max((budget // (256 * itemsize)) // 128 * 128, 128)
    else:
        td = max(pl.cdiv(int(d_chunk), 128) * 128, 128)
    td = min(td, d_pad)
    d_full = pl.cdiv(d_pad, td) * td          # pad D to a multiple of the chunk
    xp = x if d_full == D else jnp.pad(x, ((0, 0), (0, d_full - D)))
    tm_ = _choose_row_tile(N, td, x.dtype, budget) if tm is None else min(tm, N)
    nk = d_full // td

    # Pass 1: per-row L1 sums, accumulated over D-chunks in VMEM scratch.
    norm = pl.pallas_call(
        _l1norm_sum_kernel,
        out_shape=jax.ShapeDtypeStruct((N, 1), jnp.float32),
        grid=(pl.cdiv(N, tm_), nk),
        in_specs=[pl.BlockSpec((tm_, td), lambda i, k: (i, k))],
        out_specs=pl.BlockSpec((tm_, 1), lambda i, k: (i, 0)),
        scratch_shapes=[pltpu.VMEM((tm_, 1), jnp.float32)],
        compiler_params=pltpu.CompilerParams(
            dimension_semantics=("parallel", "arbitrary"), **cp_extra),
        cost_estimate=pl.CostEstimate(
            flops=2 * N * d_full,
            transcendentals=0,
            bytes_accessed=N * d_full * itemsize + N * 4),
    )(xp)

    # Pass 2: rescale every D-chunk by the row norm.
    out = pl.pallas_call(
        _l1norm_scale_kernel,
        out_shape=jax.ShapeDtypeStruct((N, d_full), x.dtype),
        grid=(pl.cdiv(N, tm_), nk),
        in_specs=[pl.BlockSpec((tm_, 1), lambda i, k: (i, 0)),
                  pl.BlockSpec((tm_, td), lambda i, k: (i, k))],
        out_specs=pl.BlockSpec((tm_, td), lambda i, k: (i, k)),
        compiler_params=pltpu.CompilerParams(
            dimension_semantics=("parallel", "parallel"), **cp_extra),
        cost_estimate=pl.CostEstimate(
            flops=N * d_full,
            transcendentals=0,
            bytes_accessed=2 * N * d_full * itemsize + N * 4),
    )(norm, xp)
    return out if d_full == D else out[:, :D]


# --------------------------------------------------------------------------- #
# Self-test
# --------------------------------------------------------------------------- #
if __name__ == "__main__":
    def ref_l1norm(x):
        xf = x.astype(jnp.float32)
        return xf / (jnp.sum(jnp.abs(xf), axis=1, keepdims=True) + EPS)

    # 1) canonical HardNet-style shape: (batch, 128) descriptors
    x = jax.random.normal(jax.random.PRNGKey(0), (16, 128), dtype=jnp.float32)
    out = jax.block_until_ready(l1norm(x))
    assert out.shape == x.shape and out.dtype == x.dtype
    assert jnp.allclose(out, ref_l1norm(x), atol=1e-6, rtol=1e-6)

    # 2) ragged N (boundary-block masking)
    x2 = jax.random.normal(jax.random.PRNGKey(1), (20, 128), dtype=jnp.float32)
    out2 = jax.block_until_ready(l1norm(x2, tm=8))
    assert jnp.allclose(out2, ref_l1norm(x2), atol=1e-6, rtol=1e-6)

    # 3) D not a multiple of 128 (lane-dense padding path)
    x3 = jax.random.normal(jax.random.PRNGKey(2), (16, 96), dtype=jnp.float32)
    out3 = jax.block_until_ready(l1norm(x3))
    assert out3.shape == x3.shape
    assert jnp.allclose(out3, ref_l1norm(x3), atol=1e-6, rtol=1e-6)

    # 4) bf16 input (scale computed in f32, single cast at the end)
    x4 = jax.random.normal(jax.random.PRNGKey(3), (16, 128), dtype=jnp.bfloat16)
    out4 = jax.block_until_ready(l1norm(x4))
    assert out4.dtype == jnp.bfloat16
    assert jnp.allclose(out4.astype(jnp.float32), ref_l1norm(x4),
                        atol=1e-2, rtol=1e-2)

    # 5) forced D-chunked two-pass path (exercises the wide-D code at small shapes)
    x5 = jax.random.normal(jax.random.PRNGKey(4), (32, 256), dtype=jnp.float32)
    out5 = jax.block_until_ready(l1norm(x5, d_chunk=128))
    assert jnp.allclose(out5, ref_l1norm(x5), atol=1e-6, rtol=1e-6)

    print("KERNEL_OK")
</pallas_src>

<mosaic_0001>
module attributes {stable_mosaic.version = 11 : i64} {
  func.func @_l1norm_kernel(%arg0: i32, %arg1: memref<16x128xf32, #tpu.memory_space<vmem>>, %arg2: memref<16x128xf32, #tpu.memory_space<vmem>>) attributes {dimension_semantics = [#tpu.dimension_semantics<parallel>], iteration_bounds = array<i64: 1>, scalar_prefetch = 0 : i64, scratch_operands = 0 : i64, tpu.core_type = #tpu.core_type<tc>, window_params = [{transform_indices = @transform_0, window_bounds = array<i64: 16, 128>}, {transform_indices = @transform_1, window_bounds = array<i64: 16, 128>}]} {
    %c0 = arith.constant 0 : index
    %c0_0 = arith.constant 0 : index
    %0 = vector.load %arg1[%c0, %c0_0] : memref<16x128xf32, #tpu.memory_space<vmem>>, vector<16x128xf32>
    %1 = math.absf %0 : vector<16x128xf32>
    %cst = arith.constant dense<0.000000e+00> : vector<16xf32>
    %2 = vector.multi_reduction <add>, %1, %cst [1] : vector<16x128xf32> to vector<16xf32>
    %3 = vector.shape_cast %2 : vector<16xf32> to vector<16x1xf32>
    %cst_1 = arith.constant 1.000000e-10 : f32
    %4 = vector.broadcast %cst_1 : f32 to vector<16x1xf32>
    %5 = arith.addf %3, %4 : vector<16x1xf32>
    %6 = tpu.reciprocal %5 : vector<16x1xf32> -> vector<16x1xf32>
    %7 = vector.broadcast %6 : vector<16x1xf32> to vector<16x128xf32>
    %8 = arith.mulf %0, %7 : vector<16x128xf32>
    %c0_2 = arith.constant 0 : index
    %c0_3 = arith.constant 0 : index
    %9 = vector.load %arg2[%c0_2, %c0_3] : memref<16x128xf32, #tpu.memory_space<vmem>>, vector<16x128xf32>
    tpu.vector_store %arg2[%c0_2, %c0_3], %8 {strides = array<i32>} : memref<16x128xf32, #tpu.memory_space<vmem>>, vector<16x128xf32>,
    return
  }
  func.func @transform_0(%arg0: i32) -> (i32, i32) {
    %c0_i32 = arith.constant 0 : i32
    %c0_i32_0 = arith.constant 0 : i32
    return %arg0, %c0_i32 : i32, i32
  }
  func.func @transform_1(%arg0: i32) -> (i32, i32) {
    %c0_i32 = arith.constant 0 : i32
    %c0_i32_0 = arith.constant 0 : i32
    return %arg0, %c0_i32 : i32, i32
  }
}

</mosaic_0001>

<llo_original>
// kernel: tpu_custom_call.1
$region0: #{tpu_custom_call.1}
  #allocation0 [shape = 'u32[]', space=smem, size = 0x4, offset = 0x4, fixed_abs, tag = 'smem constant byte address 0x4 - core index']
  #allocation1 [shape = 'u32[144,128]{1,0:T(1,128)}', space=vmem, size = 0x12000, scoped, tag = 'internal scratch']
  %s0 = inlined_call_operand.hbm [shape: f32[16,128], index: 0, kind: input, shape index: {}]
  %s1 = inlined_call_operand.hbm [shape: f32[16,128], index: 1, kind: output, shape index: {}]
  %s2 = sld [smem:[#allocation0]]
  $region18: #{tpu_custom_call.1} parent=0
    _
  %s4 = ssub.s32 1, %s2
  %s5 = scalar_select 0, %s4, %s2
  $region1: #{tpu_custom_call.1} parent=0
    #allocation2 [shape = 'u8[8192]{0}', space=vmem, size = 0x2000, scoped, tag = 'input window, operand 0, single buffered']
    #allocation3 [shape = 's32[1]{0}', space=sflag, size = 0x4, scoped, tag = 'scoped memory for tpu_custom_call.1']
    #allocation4 [shape = 's32[1]{0}', space=sflag, size = 0x4, scoped, tag = 'scoped memory for tpu_custom_call.1']
    #allocation5 [shape = 'u8[8192]{0}', space=vmem, size = 0x2000, scoped, tag = 'output window, operand 0, single buffered']
    %6 = vsyncpa [#allocation3], 0
    %7 = vsyncpa [#allocation4], 0
    // Predicated region
    $region2: #{tpu_custom_call.1} parent=1 // pred_check
      _
    $region3: #{tpu_custom_call.1} parent=1 // pred_check_branch
      %9 = sbr.rel (0) target = $region5
    $region4: #{tpu_custom_call.1} parent=1 // pred_region
      %s11 = ssub.s32 256, 256
      %12 = vsyncadd [#allocation3], %s11
      %s13 = sshll.u32 [#allocation2], 4
      %s14 = int_to_ptr.vmem [resolvable:$true] %s13
      %19 = dma.hbm_to_vmem [thread:$0]  %s0, 256, %s14, [#allocation3], 128, 128, 8
    $region5: #{tpu_custom_call.1} parent=1 // pred_fallthru
      _
    // Predicated region
    $region6: #{tpu_custom_call.1} parent=1 // pred_check
      _
    $region7: #{tpu_custom_call.1} parent=1 // pred_check_branch
      %21 = sbr.rel (0) target = $region9
    $region8: #{tpu_custom_call.1} parent=1 // pred_region
      %22 = dma.done [#allocation3], 256
    $region9: #{tpu_custom_call.1} parent=1 // pred_fallthru
      _
    %v23 = vld [vmem:[#allocation2] sm:$0xff]
    %v24 = vld [vmem:[#allocation2 + $0x8] sm:$0xff]
    %v25 = vand.u32 2147483647, %v23
    %v26 = vand.u32 2147483647, %v24
    %27 = vadd.xlane.f32.xlu0 %v25
    %v28 = vpop.xlane.xlu0 %27
    %29 = vadd.xlane.f32.xlu0 %v26
    %v30 = vpop.xlane.xlu0 %29
    %v31 = vadd.f32 %v28, 1e-10
    %v32 = vadd.f32 %v30, 1e-10
    %v33 = vrcp.pop %v31
    %v34 = vrcp.pop %v32
    %v35 = vmul.f32 %v23, %v33
    %v36 = vmul.f32 %v24, %v34
    %37 = vst [vmem:[#allocation5] sm:$0xff] %v35
    %38 = vst [vmem:[#allocation5 + $0x8] sm:$0xff] %v36
    // Predicated region
    $region10: #{tpu_custom_call.1} parent=1 // pred_check
      _
    $region11: #{tpu_custom_call.1} parent=1 // pred_check_branch
      %40 = sbr.rel (0) target = $region13
    $region12: #{tpu_custom_call.1} parent=1 // pred_region
      %s42 = ssub.s32 256, 256
      %43 = vsyncadd [#allocation4], %s42
      %s44 = sshll.u32 [#allocation5], 4
      %s45 = int_to_ptr.vmem [resolvable:$true] %s44
      %50 = dma.vmem_to_hbm [thread:$0]  %s45, 256, %s1, [#allocation4], 128, 128, 8
    $region13: #{tpu_custom_call.1} parent=1 // pred_fallthru
      _
    // Predicated region
    $region14: #{tpu_custom_call.1} parent=1 // pred_check
      _
    $region15: #{tpu_custom_call.1} parent=1 // pred_check_branch
      %52 = sbr.rel (0) target = $region17
    $region16: #{tpu_custom_call.1} parent=1 // pred_region
      %53 = dma.done [#allocation4], 256
    $region17: #{tpu_custom_call.1} parent=1 // pred_fallthru
      _
    %54 = vsyncpa [#allocation3], 1
    %55 = vsyncpa [#allocation4], 1

</llo_original>
